<compile_context>
chip_gen: v7x
topology: tpu7x:2x2x1
jax: 0.10.0
libtpu: 0.0.40
codegen_flags: <defaults>
</compile_context>

<pallas_src>
import jax
import jax.numpy as jnp
from jax.experimental import pallas as pl
from jax.experimental.pallas import tpu as pltpu

FEAT_DIM = 2048        # fixed by nn.Linear(2048, hidden_dim)
HIDDEN_DIM = 32        # args.hidden_dim (small for the demo)
CLASS_NUM = 10         # args.class_num
BN_EPS = 1e-5
LANE = 128


def _round_up(n, m):
    return (n + m - 1) // m * m


def classifier_kernel(x_ref, w1_ref, b1_ref, w2_ref, b2_ref, o_ref):
    # In-kernel bf16 cast of the streamed x tile (x is read from HBM once, f32).
    xb = x_ref[...].astype(jnp.bfloat16)
    # fc1 (BatchNorm folded into w1/b1): bf16 x bf16 -> f32 accumulation (MXU).
    h = jnp.dot(xb, w1_ref[...], preferred_element_type=jnp.float32)
    # bias + ReLU; Dropout(p=0.5) is identity in eval mode.
    h = jnp.maximum(h + b1_ref[...], 0.0)
    # fc2: bf16 x bf16 -> f32 acc, f32 bias, lane-dense bf16 store.
    o = jnp.dot(h.astype(jnp.bfloat16), w2_ref[...],
                preferred_element_type=jnp.float32) + b2_ref[...]
    o_ref[...] = o.astype(o_ref.dtype)


def fold_and_pad_params(params):
    """One-time parameter prep (hoisted out of the per-call path):
    fold BatchNorm1d (eval / running stats) into fc1, lane-pad hidden & class
    dims to 128, and cast the matmul weights to bf16."""
    w1, b1, gamma, beta, mean, var, w2, b2 = params
    H = w1.shape[1]
    C = w2.shape[1]
    scale = gamma * jax.lax.rsqrt(var + BN_EPS)            # (1, H)
    w1f = w1 * scale                                        # (F, H)
    b1f = (b1 - mean) * scale + beta                        # (1, H)
    Hp = _round_up(H, LANE)
    Cp = _round_up(C, LANE)
    w1p = jnp.zeros((FEAT_DIM, Hp), jnp.bfloat16).at[:, :H].set(
        w1f.astype(jnp.bfloat16))
    b1p = jnp.zeros((1, Hp), jnp.float32).at[:, :H].set(b1f)
    w2p = jnp.zeros((Hp, Cp), jnp.bfloat16).at[:H, :C].set(
        w2.astype(jnp.bfloat16))
    b2p = jnp.zeros((1, Cp), jnp.float32).at[:, :C].set(b2)
    return (w1p, b1p, w2p, b2p), C


def model4_classifier_head(x, folded_params, class_num=CLASS_NUM, *, tile_b=512):
    """x: [B, 2048] f32 feature map from the backbone -> [B, class_num] f32."""
    B = x.shape[0]
    w1p, b1p, w2p, b2p = folded_params
    Hp = w1p.shape[1]
    Cp = w2p.shape[1]

    # Batch tile: multiple of 16 (bf16 sublane packing of h / output), capped so
    # large B gives >= ~8 grid steps (megacore split + double-buffer overlap).
    tb_target = _round_up(max(1, pl.cdiv(B, 8)), 16)
    tb = max(16, min(tile_b, tb_target))
    grid = (pl.cdiv(B, tb),)   # partial last block; OOB writeback is masked

    cost = pl.CostEstimate(
        flops=2 * B * FEAT_DIM * Hp + 2 * B * Hp * Cp,
        transcendentals=0,
        bytes_accessed=(B * FEAT_DIM * 4          # x (f32, read exactly once)
                        + FEAT_DIM * Hp * 2       # w1 (bf16, BN-folded)
                        + Hp * Cp * 2             # w2 (bf16)
                        + B * Cp * 2),            # output (bf16)
    )

    out = pl.pallas_call(
        classifier_kernel,
        out_shape=jax.ShapeDtypeStruct((B, Cp), jnp.bfloat16),
        grid=grid,
        in_specs=[
            pl.BlockSpec((tb, FEAT_DIM), lambda i: (i, 0)),   # x tile, streamed
            pl.BlockSpec((FEAT_DIM, Hp), lambda i: (0, 0)),   # w1 (BN-folded)
            pl.BlockSpec((1, Hp), lambda i: (0, 0)),          # b1 (BN-folded)
            pl.BlockSpec((Hp, Cp), lambda i: (0, 0)),         # w2
            pl.BlockSpec((1, Cp), lambda i: (0, 0)),          # b2
        ],
        out_specs=pl.BlockSpec((tb, Cp), lambda i: (i, 0)),
        compiler_params=pltpu.CompilerParams(
            dimension_semantics=("parallel",),
            vmem_limit_bytes=32 * 1024 * 1024,
        ),
        cost_estimate=cost,
    )(x, w1p, b1p, w2p, b2p)

    # Slice out the real classes; cast back to f32 for callers (tiny).
    return out[:, :class_num].astype(jnp.float32)


def init_params(key):
    k1, k2, k3, k4 = jax.random.split(key, 4)
    # fc1: Linear(2048, H) — weights stored [in, out]
    w1 = jax.random.normal(k1, (FEAT_DIM, HIDDEN_DIM), jnp.float32) * 0.02
    b1 = jnp.zeros((1, HIDDEN_DIM), jnp.float32)
    # BatchNorm1d(H) running stats / affine params
    gamma = jnp.ones((1, HIDDEN_DIM), jnp.float32)
    beta = jnp.zeros((1, HIDDEN_DIM), jnp.float32)
    mean = jax.random.normal(k2, (1, HIDDEN_DIM), jnp.float32) * 0.1
    var = jnp.abs(jax.random.normal(k3, (1, HIDDEN_DIM), jnp.float32)) + 1.0
    # fc2: Linear(H, class_num)
    w2 = jax.random.normal(k4, (HIDDEN_DIM, CLASS_NUM), jnp.float32) * 0.1
    b2 = jnp.zeros((1, CLASS_NUM), jnp.float32)
    return (w1, b1, gamma, beta, mean, var, w2, b2)


def reference(x, params):
    w1, b1, gamma, beta, mean, var, w2, b2 = params
    h = x @ w1 + b1
    h = (h - mean) / jnp.sqrt(var + BN_EPS) * gamma + beta
    h = jnp.maximum(h, 0.0)
    return h @ w2 + b2


if __name__ == "__main__":
    key = jax.random.PRNGKey(0)
    kx, kp = jax.random.split(key)
    B = 8
    x = jax.random.normal(kx, (B, FEAT_DIM), jnp.float32)  # backbone feature map
    params = init_params(kp)

    folded_params, class_num = fold_and_pad_params(params)  # one-time prep
    out = model4_classifier_head(x, folded_params, class_num)
    out = jax.block_until_ready(out)

    ref = reference(x, params)
    assert out.shape == (B, CLASS_NUM)
    # bf16 fc1/fc2 weights + bf16 output store -> loosened tolerance vs f32 ref.
    assert jnp.allclose(out, ref, atol=3e-2, rtol=3e-2), "mismatch vs JAX reference"
    print("KERNEL_OK")
</pallas_src>

<mosaic_0001>
module attributes {stable_mosaic.version = 11 : i64} {
  func.func @classifier_kernel(%arg0: i32, %arg1: memref<16x2048xf32, #tpu.memory_space<vmem>>, %arg2: memref<2048x128xbf16, #tpu.memory_space<vmem>>, %arg3: memref<1x128xf32, #tpu.memory_space<vmem>>, %arg4: memref<128x128xbf16, #tpu.memory_space<vmem>>, %arg5: memref<1x128xf32, #tpu.memory_space<vmem>>, %arg6: memref<16x128xbf16, #tpu.memory_space<vmem>>) attributes {dimension_semantics = [#tpu.dimension_semantics<parallel>], iteration_bounds = array<i64: 1>, scalar_prefetch = 0 : i64, scratch_operands = 0 : i64, tpu.core_type = #tpu.core_type<tc>, window_params = [{transform_indices = @transform_0, window_bounds = array<i64: 16, 2048>}, {pipeline_mode = #tpu.pipeline_mode<synchronous>, transform_indices = @transform_1, window_bounds = array<i64: 2048, 128>}, {pipeline_mode = #tpu.pipeline_mode<synchronous>, transform_indices = @transform_2, window_bounds = array<i64: 1, 128>}, {pipeline_mode = #tpu.pipeline_mode<synchronous>, transform_indices = @transform_3, window_bounds = array<i64: 128, 128>}, {pipeline_mode = #tpu.pipeline_mode<synchronous>, transform_indices = @transform_4, window_bounds = array<i64: 1, 128>}, {transform_indices = @transform_5, window_bounds = array<i64: 16, 128>}]} {
    %c0 = arith.constant 0 : index
    %c0_0 = arith.constant 0 : index
    %0 = vector.load %arg1[%c0, %c0_0] : memref<16x2048xf32, #tpu.memory_space<vmem>>, vector<16x2048xf32>
    %1 = arith.truncf %0 : vector<16x2048xf32> to vector<16x2048xbf16>
    %c0_1 = arith.constant 0 : index
    %c0_2 = arith.constant 0 : index
    %2 = vector.load %arg2[%c0_1, %c0_2] : memref<2048x128xbf16, #tpu.memory_space<vmem>>, vector<2048x128xbf16>
    %cst = arith.constant dense<0.000000e+00> : vector<16x128xf32>
    %3 = tpu.matmul %1, %2, %cst {dimension_numbers = #tpu.dot_dimension_numbers<[1], [0], [0], [1], [0, 0, 1, 1], [], []>} : vector<16x2048xbf16>, vector<2048x128xbf16>, vector<16x128xf32> -> vector<16x128xf32>
    %c0_3 = arith.constant 0 : index
    %c0_4 = arith.constant 0 : index
    %4 = vector.load %arg3[%c0_3, %c0_4] : memref<1x128xf32, #tpu.memory_space<vmem>>, vector<1x128xf32>
    %5 = vector.broadcast %4 : vector<1x128xf32> to vector<16x128xf32>
    %6 = arith.addf %3, %5 : vector<16x128xf32>
    %cst_5 = arith.constant 0.000000e+00 : f32
    %7 = vector.broadcast %cst_5 : f32 to vector<16x128xf32>
    %8 = arith.maximumf %6, %7 : vector<16x128xf32>
    %9 = arith.truncf %8 : vector<16x128xf32> to vector<16x128xbf16>
    %c0_6 = arith.constant 0 : index
    %c0_7 = arith.constant 0 : index
    %10 = vector.load %arg4[%c0_6, %c0_7] : memref<128x128xbf16, #tpu.memory_space<vmem>>, vector<128x128xbf16>
    %cst_8 = arith.constant dense<0.000000e+00> : vector<16x128xf32>
    %11 = tpu.matmul %9, %10, %cst_8 {dimension_numbers = #tpu.dot_dimension_numbers<[1], [0], [0], [1], [0, 0, 1, 1], [], []>} : vector<16x128xbf16>, vector<128x128xbf16>, vector<16x128xf32> -> vector<16x128xf32>
    %c0_9 = arith.constant 0 : index
    %c0_10 = arith.constant 0 : index
    %12 = vector.load %arg5[%c0_9, %c0_10] : memref<1x128xf32, #tpu.memory_space<vmem>>, vector<1x128xf32>
    %13 = vector.broadcast %12 : vector<1x128xf32> to vector<16x128xf32>
    %14 = arith.addf %11, %13 : vector<16x128xf32>
    %15 = arith.truncf %14 : vector<16x128xf32> to vector<16x128xbf16>
    %c0_11 = arith.constant 0 : index
    %c0_12 = arith.constant 0 : index
    %16 = vector.load %arg6[%c0_11, %c0_12] : memref<16x128xbf16, #tpu.memory_space<vmem>>, vector<16x128xbf16>
    tpu.vector_store %arg6[%c0_11, %c0_12], %15 {strides = array<i32>} : memref<16x128xbf16, #tpu.memory_space<vmem>>, vector<16x128xbf16>,
    return
  }
  func.func @transform_0(%arg0: i32) -> (i32, i32) {
    %c0_i32 = arith.constant 0 : i32
    %c0_i32_0 = arith.constant 0 : i32
    return %arg0, %c0_i32 : i32, i32
  }
  func.func @transform_1(%arg0: i32) -> (i32, i32) {
    %c0_i32 = arith.constant 0 : i32
    %c0_i32_0 = arith.constant 0 : i32
    %c0_i32_1 = arith.constant 0 : i32
    return %c0_i32, %c0_i32_0 : i32, i32
  }
  func.func @transform_2(%arg0: i32) -> (i32, i32) {
    %c0_i32 = arith.constant 0 : i32
    %c0_i32_0 = arith.constant 0 : i32
    %c0_i32_1 = arith.constant 0 : i32
    return %c0_i32, %c0_i32_0 : i32, i32
  }
  func.func @transform_3(%arg0: i32) -> (i32, i32) {
    %c0_i32 = arith.constant 0 : i32
    %c0_i32_0 = arith.constant 0 : i32
    %c0_i32_1 = arith.constant 0 : i32
    return %c0_i32, %c0_i32_0 : i32, i32
  }
  func.func @transform_4(%arg0: i32) -> (i32, i32) {
    %c0_i32 = arith.constant 0 : i32
    %c0_i32_0 = arith.constant 0 : i32
    %c0_i32_1 = arith.constant 0 : i32
    return %c0_i32, %c0_i32_0 : i32, i32
  }
  func.func @transform_5(%arg0: i32) -> (i32, i32) {
    %c0_i32 = arith.constant 0 : i32
    %c0_i32_0 = arith.constant 0 : i32
    return %arg0, %c0_i32 : i32, i32
  }
}

</mosaic_0001>

<llo_original>
// kernel: tpu_custom_call.1
$region0: #{tpu_custom_call.1}
  #allocation0 [shape = 'u32[]', space=smem, size = 0x4, offset = 0x4, fixed_abs, tag = 'smem constant byte address 0x4 - core index']
  #allocation1 [shape = 'u32[144,128]{1,0:T(1,128)}', space=vmem, size = 0x12000, scoped, tag = 'internal scratch']
  %s0 = inlined_call_operand.hbm [shape: f32[8,2048], index: 0, kind: input, shape index: {}]
  %s1 = inlined_call_operand.hbm [shape: bf16[2048,128], index: 1, kind: input, shape index: {}]
  %s2 = inlined_call_operand.vmem [shape: f32[1,128], index: 2, kind: input, shape index: {}]
  %s3 = inlined_call_operand.hbm [shape: bf16[128,128], index: 3, kind: input, shape index: {}]
  %s4 = inlined_call_operand.vmem [shape: f32[1,128], index: 4, kind: input, shape index: {}]
  %s5 = inlined_call_operand.hbm [shape: bf16[8,128], index: 5, kind: output, shape index: {}]
  %s6 = sld [smem:[#allocation0]]
  $region42: #{tpu_custom_call.1} parent=0
    _
  %s8 = ssub.s32 1, %s6
  %s9 = scalar_select 0, %s8, %s6
  $region1: #{tpu_custom_call.1} parent=0
    #allocation2 [shape = 'u8[131072]{0}', space=vmem, size = 0x20000, scoped, tag = 'input window, operand 0, single buffered']
    #allocation3 [shape = 's32[1]{0}', space=sflag, size = 0x4, scoped, tag = 'scoped memory for tpu_custom_call.1']
    #allocation4 [shape = 's32[1]{0}', space=sflag, size = 0x4, scoped, tag = 'scoped memory for tpu_custom_call.1']
    #allocation5 [shape = 'u8[524288]{0}', space=vmem, size = 0x80000, scoped, tag = 'input window, operand 1, single buffered']
    #allocation6 [shape = 's32[1]{0}', space=sflag, size = 0x4, scoped, tag = 'scoped memory for tpu_custom_call.1']
    #allocation7 [shape = 'u8[32768]{0}', space=vmem, size = 0x8000, scoped, tag = 'input window, operand 3, single buffered']
    #allocation8 [shape = 'u8[4096]{0}', space=vmem, size = 0x1000, scoped, tag = 'output window, operand 0, single buffered']
    %10 = vsyncpa [#allocation3], 0
    %11 = vsyncpa [#allocation6], 0
    %12 = vsyncpa [#allocation4], 0
    // Predicated region
    $region2: #{tpu_custom_call.1} parent=1 // pred_check
      _
    $region3: #{tpu_custom_call.1} parent=1 // pred_check_branch
      %14 = sbr.rel (0) target = $region5
    $region4: #{tpu_custom_call.1} parent=1 // pred_region
      %s16 = ssub.s32 4096, 2048
      %17 = vsyncadd [#allocation3], %s16
      %s18 = sshll.u32 [#allocation2], 4
      %s19 = int_to_ptr.vmem [resolvable:$true] %s18
      %24 = dma.hbm_to_vmem [thread:$0]  %s0, 2048, %s19, [#allocation3], 2048, 2048, 128
    $region5: #{tpu_custom_call.1} parent=1 // pred_fallthru
      _
    // Predicated region
    $region6: #{tpu_custom_call.1} parent=1 // pred_check
      _
    $region7: #{tpu_custom_call.1} parent=1 // pred_check_branch
      %26 = sbr.rel (0) target = $region9
    $region8: #{tpu_custom_call.1} parent=1 // pred_region
      %s28 = ssub.s32 16384, 16384
      %29 = vsyncadd [#allocation6], %s28
      %s30 = sshll.u32 [#allocation5], 4
      %s31 = int_to_ptr.vmem [resolvable:$true] %s30
      %36 = dma.hbm_to_vmem [thread:$0]  %s1, 16384, %s31, [#allocation6], 64, 64, 4
    $region9: #{tpu_custom_call.1} parent=1 // pred_fallthru
      _
    // Predicated region
    $region10: #{tpu_custom_call.1} parent=1 // pred_check
      _
    $region11: #{tpu_custom_call.1} parent=1 // pred_check_branch
      %38 = sbr.rel (0) target = $region13
    $region12: #{tpu_custom_call.1} parent=1 // pred_region
      _
    $region13: #{tpu_custom_call.1} parent=1 // pred_fallthru
      _
    // Predicated region
    $region14: #{tpu_custom_call.1} parent=1 // pred_check
      _
    $region15: #{tpu_custom_call.1} parent=1 // pred_check_branch
      %40 = sbr.rel (0) target = $region17
    $region16: #{tpu_custom_call.1} parent=1 // pred_region
      %s42 = ssub.s32 1024, 1024
      %43 = vsyncadd [#allocation6], %s42
      %s44 = sshll.u32 [#allocation7], 4
      %s45 = int_to_ptr.vmem [resolvable:$true] %s44
      %50 = dma.hbm_to_vmem [thread:$0]  %s3, 1024, %s45, [#allocation6], 64, 64, 4
    $region17: #{tpu_custom_call.1} parent=1 // pred_fallthru
      _
    // Predicated region
    $region18: #{tpu_custom_call.1} parent=1 // pred_check
      _
    $region19: #{tpu_custom_call.1} parent=1 // pred_check_branch
      %52 = sbr.rel (0) target = $region21
    $region20: #{tpu_custom_call.1} parent=1 // pred_region
      _
    $region21: #{tpu_custom_call.1} parent=1 // pred_fallthru
      _
    // Predicated region
    $region22: #{tpu_custom_call.1} parent=1 // pred_check
      _
    $region23: #{tpu_custom_call.1} parent=1 // pred_check_branch
      %54 = sbr.rel (0) target = $region25
    $region24: #{tpu_custom_call.1} parent=1 // pred_region
      %55 = dma.done [#allocation3], 4096
    $region25: #{tpu_custom_call.1} parent=1 // pred_fallthru
      _
    // Predicated region
    $region26: #{tpu_custom_call.1} parent=1 // pred_check
      _
    $region27: #{tpu_custom_call.1} parent=1 // pred_check_branch
      %57 = sbr.rel (0) target = $region29
    $region28: #{tpu_custom_call.1} parent=1 // pred_region
      %58 = dma.done [#allocation6], 16384
    $region29: #{tpu_custom_call.1} parent=1 // pred_fallthru
      _
    // Predicated region
    $region30: #{tpu_custom_call.1} parent=1 // pred_check
      _
    $region31: #{tpu_custom_call.1} parent=1 // pred_check_branch
      %60 = sbr.rel (0) target = $region33
    $region32: #{tpu_custom_call.1} parent=1 // pred_region
      %61 = dma.done [#allocation6], 1024
    $region33: #{tpu_custom_call.1} parent=1 // pred_fallthru
      _
    %v63 = vld [vmem:[#allocation2] sm:$0xff]
    %v64 = vld [vmem:[#allocation2 + $0x8] sm:$0xff]
    %v65 = vld [vmem:[#allocation2 + $0x10] sm:$0xff]
    %v66 = vld [vmem:[#allocation2 + $0x18] sm:$0xff]
    %v67 = vld [vmem:[#allocation2 + $0x20] sm:$0xff]
    %v68 = vld [vmem:[#allocation2 + $0x28] sm:$0xff]
    %v69 = vld [vmem:[#allocation2 + $0x30] sm:$0xff]
    %v70 = vld [vmem:[#allocation2 + $0x38] sm:$0xff]
    %v71 = vld [vmem:[#allocation2 + $0x40] sm:$0xff]
    %v72 = vld [vmem:[#allocation2 + $0x48] sm:$0xff]
    %v73 = vld [vmem:[#allocation2 + $0x50] sm:$0xff]
    %v74 = vld [vmem:[#allocation2 + $0x58] sm:$0xff]
    %v75 = vld [vmem:[#allocation2 + $0x60] sm:$0xff]
    %v76 = vld [vmem:[#allocation2 + $0x68] sm:$0xff]
    %v77 = vld [vmem:[#allocation2 + $0x70] sm:$0xff]
    %v78 = vld [vmem:[#allocation2 + $0x78] sm:$0xff]
    %v79 = vld [vmem:[#allocation2 + $0x80] sm:$0xff]
    %v80 = vld [vmem:[#allocation2 + $0x88] sm:$0xff]
    %v81 = vld [vmem:[#allocation2 + $0x90] sm:$0xff]
    %v82 = vld [vmem:[#allocation2 + $0x98] sm:$0xff]
    %v83 = vld [vmem:[#allocation2 + $0xa0] sm:$0xff]
    %v84 = vld [vmem:[#allocation2 + $0xa8] sm:$0xff]
    %v85 = vld [vmem:[#allocation2 + $0xb0] sm:$0xff]
    %v86 = vld [vmem:[#allocation2 + $0xb8] sm:$0xff]
    %v87 = vld [vmem:[#allocation2 + $0xc0] sm:$0xff]
    %v88 = vld [vmem:[#allocation2 + $0xc8] sm:$0xff]
    %v89 = vld [vmem:[#allocation2 + $0xd0] sm:$0xff]
    %v90 = vld [vmem:[#allocation2 + $0xd8] sm:$0xff]
    %v91 = vld [vmem:[#allocation2 + $0xe0] sm:$0xff]
    %v92 = vld [vmem:[#allocation2 + $0xe8] sm:$0xff]
    %v93 = vld [vmem:[#allocation2 + $0xf0] sm:$0xff]
    %v94 = vld [vmem:[#allocation2 + $0xf8] sm:$0xff]
    %v95 = vpack.c.bf16 %v79, %v63
    %v96 = vpack.c.bf16 %v80, %v64
    %v97 = vpack.c.bf16 %v81, %v65
    %v98 = vpack.c.bf16 %v82, %v66
    %v99 = vpack.c.bf16 %v83, %v67
    %v100 = vpack.c.bf16 %v84, %v68
    %v101 = vpack.c.bf16 %v85, %v69
    %v102 = vpack.c.bf16 %v86, %v70
    %v103 = vpack.c.bf16 %v87, %v71
    %v104 = vpack.c.bf16 %v88, %v72
    %v105 = vpack.c.bf16 %v89, %v73
    %v106 = vpack.c.bf16 %v90, %v74
    %v107 = vpack.c.bf16 %v91, %v75
    %v108 = vpack.c.bf16 %v92, %v76
    %v109 = vpack.c.bf16 %v93, %v77
    %v110 = vpack.c.bf16 %v94, %v78
    %v111 = vld [vmem:[#allocation5] sm:$0xf]
    %v112 = vld [vmem:[#allocation5 + $0x4] sm:$0xf]
    %v113 = vld [vmem:[#allocation5 + $0x8] sm:$0xf]
    %v114 = vld [vmem:[#allocation5 + $0xc] sm:$0xf]
    %v115 = vld [vmem:[#allocation5 + $0x10] sm:$0xf]
    %v116 = vld [vmem:[#allocation5 + $0x14] sm:$0xf]
    %v117 = vld [vmem:[#allocation5 + $0x18] sm:$0xf]
    %v118 = vld [vmem:[#allocation5 + $0x1c] sm:$0xf]
    %v119 = vld [vmem:[#allocation5 + $0x20] sm:$0xf]
    %v120 = vld [vmem:[#allocation5 + $0x24] sm:$0xf]
    %v121 = vld [vmem:[#allocation5 + $0x28] sm:$0xf]
    %v122 = vld [vmem:[#allocation5 + $0x2c] sm:$0xf]
    %v123 = vld [vmem:[#allocation5 + $0x30] sm:$0xf]
    %v124 = vld [vmem:[#allocation5 + $0x34] sm:$0xf]
    %v125 = vld [vmem:[#allocation5 + $0x38] sm:$0xf]
    %v126 = vld [vmem:[#allocation5 + $0x3c] sm:$0xf]
    %v127 = vld [vmem:[#allocation5 + $0x40] sm:$0xf]
    %v128 = vld [vmem:[#allocation5 + $0x44] sm:$0xf]
    %v129 = vld [vmem:[#allocation5 + $0x48] sm:$0xf]
    %v130 = vld [vmem:[#allocation5 + $0x4c] sm:$0xf]
    %v131 = vld [vmem:[#allocation5 + $0x50] sm:$0xf]
    %v132 = vld [vmem:[#allocation5 + $0x54] sm:$0xf]
    %v133 = vld [vmem:[#allocation5 + $0x58] sm:$0xf]
    %v134 = vld [vmem:[#allocation5 + $0x5c] sm:$0xf]
    %v135 = vld [vmem:[#allocation5 + $0x60] sm:$0xf]
    %v136 = vld [vmem:[#allocation5 + $0x64] sm:$0xf]
    %v137 = vld [vmem:[#allocation5 + $0x68] sm:$0xf]
    %v138 = vld [vmem:[#allocation5 + $0x6c] sm:$0xf]
    %v139 = vld [vmem:[#allocation5 + $0x70] sm:$0xf]
    %v140 = vld [vmem:[#allocation5 + $0x74] sm:$0xf]
    %v141 = vld [vmem:[#allocation5 + $0x78] sm:$0xf]
    %v142 = vld [vmem:[#allocation5 + $0x7c] sm:$0xf]
    %v143 = vld [vmem:[#allocation5 + $0x80] sm:$0xf]
    %v144 = vld [vmem:[#allocation5 + $0x84] sm:$0xf]
    %v145 = vld [vmem:[#allocation5 + $0x88] sm:$0xf]
    %v146 = vld [vmem:[#allocation5 + $0x8c] sm:$0xf]
    %v147 = vld [vmem:[#allocation5 + $0x90] sm:$0xf]
    %v148 = vld [vmem:[#allocation5 + $0x94] sm:$0xf]
    %v149 = vld [vmem:[#allocation5 + $0x98] sm:$0xf]
    %v150 = vld [vmem:[#allocation5 + $0x9c] sm:$0xf]
    %v151 = vld [vmem:[#allocation5 + $0xa0] sm:$0xf]
    %v152 = vld [vmem:[#allocation5 + $0xa4] sm:$0xf]
    %v153 = vld [vmem:[#allocation5 + $0xa8] sm:$0xf]
    %v154 = vld [vmem:[#allocation5 + $0xac] sm:$0xf]
    %v155 = vld [vmem:[#allocation5 + $0xb0] sm:$0xf]
    %v156 = vld [vmem:[#allocation5 + $0xb4] sm:$0xf]
    %v157 = vld [vmem:[#allocation5 + $0xb8] sm:$0xf]
    %v158 = vld [vmem:[#allocation5 + $0xbc] sm:$0xf]
    %v159 = vld [vmem:[#allocation5 + $0xc0] sm:$0xf]
    %v160 = vld [vmem:[#allocation5 + $0xc4] sm:$0xf]
    %v161 = vld [vmem:[#allocation5 + $0xc8] sm:$0xf]
    %v162 = vld [vmem:[#allocation5 + $0xcc] sm:$0xf]
    %v163 = vld [vmem:[#allocation5 + $0xd0] sm:$0xf]
    %v164 = vld [vmem:[#allocation5 + $0xd4] sm:$0xf]
    %v165 = vld [vmem:[#allocation5 + $0xd8] sm:$0xf]
    %v166 = vld [vmem:[#allocation5 + $0xdc] sm:$0xf]
    %v167 = vld [vmem:[#allocation5 + $0xe0] sm:$0xf]
    %v168 = vld [vmem:[#allocation5 + $0xe4] sm:$0xf]
    %v169 = vld [vmem:[#allocation5 + $0xe8] sm:$0xf]
    %v170 = vld [vmem:[#allocation5 + $0xec] sm:$0xf]
    %v171 = vld [vmem:[#allocation5 + $0xf0] sm:$0xf]
    %v172 = vld [vmem:[#allocation5 + $0xf4] sm:$0xf]
    %v173 = vld [vmem:[#allocation5 + $0xf8] sm:$0xf]
    %v174 = vld [vmem:[#allocation5 + $0xfc] sm:$0xf]
    %v175 = vld [vmem:[#allocation5 + $0x100] sm:$0xf]
    %v176 = vld [vmem:[#allocation5 + $0x104] sm:$0xf]
    %v177 = vld [vmem:[#allocation5 + $0x108] sm:$0xf]
    %v178 = vld [vmem:[#allocation5 + $0x10c] sm:$0xf]
    %v179 = vld [vmem:[#allocation5 + $0x110] sm:$0xf]
    %v180 = vld [vmem:[#allocation5 + $0x114] sm:$0xf]
    %v181 = vld [vmem:[#allocation5 + $0x118] sm:$0xf]
    %v182 = vld [vmem:[#allocation5 + $0x11c] sm:$0xf]
    %v183 = vld [vmem:[#allocation5 + $0x120] sm:$0xf]
    %v184 = vld [vmem:[#allocation5 + $0x124] sm:$0xf]
    %v185 = vld [vmem:[#allocation5 + $0x128] sm:$0xf]
    %v186 = vld [vmem:[#allocation5 + $0x12c] sm:$0xf]
    %v187 = vld [vmem:[#allocation5 + $0x130] sm:$0xf]
    %v188 = vld [vmem:[#allocation5 + $0x134] sm:$0xf]
    %v189 = vld [vmem:[#allocation5 + $0x138] sm:$0xf]
    %v190 = vld [vmem:[#allocation5 + $0x13c] sm:$0xf]
    %v191 = vld [vmem:[#allocation5 + $0x140] sm:$0xf]
    %v192 = vld [vmem:[#allocation5 + $0x144] sm:$0xf]
    %v193 = vld [vmem:[#allocation5 + $0x148] sm:$0xf]
    %v194 = vld [vmem:[#allocation5 + $0x14c] sm:$0xf]
    %v195 = vld [vmem:[#allocation5 + $0x150] sm:$0xf]
    %v196 = vld [vmem:[#allocation5 + $0x154] sm:$0xf]
    %v197 = vld [vmem:[#allocation5 + $0x158] sm:$0xf]
    %v198 = vld [vmem:[#allocation5 + $0x15c] sm:$0xf]
    %v199 = vld [vmem:[#allocation5 + $0x160] sm:$0xf]
    %v200 = vld [vmem:[#allocation5 + $0x164] sm:$0xf]
    %v201 = vld [vmem:[#allocation5 + $0x168] sm:$0xf]
    %v202 = vld [vmem:[#allocation5 + $0x16c] sm:$0xf]
    %v203 = vld [vmem:[#allocation5 + $0x170] sm:$0xf]
    %v204 = vld [vmem:[#allocation5 + $0x174] sm:$0xf]
    %v205 = vld [vmem:[#allocation5 + $0x178] sm:$0xf]
    %v206 = vld [vmem:[#allocation5 + $0x17c] sm:$0xf]
    %v207 = vld [vmem:[#allocation5 + $0x180] sm:$0xf]
    %v208 = vld [vmem:[#allocation5 + $0x184] sm:$0xf]
    %v209 = vld [vmem:[#allocation5 + $0x188] sm:$0xf]
    %v210 = vld [vmem:[#allocation5 + $0x18c] sm:$0xf]
    %v211 = vld [vmem:[#allocation5 + $0x190] sm:$0xf]
    %v212 = vld [vmem:[#allocation5 + $0x194] sm:$0xf]
    %v213 = vld [vmem:[#allocation5 + $0x198] sm:$0xf]
    %v214 = vld [vmem:[#allocation5 + $0x19c] sm:$0xf]
    %v215 = vld [vmem:[#allocation5 + $0x1a0] sm:$0xf]
    %v216 = vld [vmem:[#allocation5 + $0x1a4] sm:$0xf]
    %v217 = vld [vmem:[#allocation5 + $0x1a8] sm:$0xf]
    %v218 = vld [vmem:[#allocation5 + $0x1ac] sm:$0xf]
    %v219 = vld [vmem:[#allocation5 + $0x1b0] sm:$0xf]
    %v220 = vld [vmem:[#allocation5 + $0x1b4] sm:$0xf]
    %v221 = vld [vmem:[#allocation5 + $0x1b8] sm:$0xf]
    %v222 = vld [vmem:[#allocation5 + $0x1bc] sm:$0xf]
    %v223 = vld [vmem:[#allocation5 + $0x1c0] sm:$0xf]
    %v224 = vld [vmem:[#allocation5 + $0x1c4] sm:$0xf]
    %v225 = vld [vmem:[#allocation5 + $0x1c8] sm:$0xf]
    %v226 = vld [vmem:[#allocation5 + $0x1cc] sm:$0xf]
    %v227 = vld [vmem:[#allocation5 + $0x1d0] sm:$0xf]
    %v228 = vld [vmem:[#allocation5 + $0x1d4] sm:$0xf]
    %v229 = vld [vmem:[#allocation5 + $0x1d8] sm:$0xf]
    %v230 = vld [vmem:[#allocation5 + $0x1dc] sm:$0xf]
    %v231 = vld [vmem:[#allocation5 + $0x1e0] sm:$0xf]
    %v232 = vld [vmem:[#allocation5 + $0x1e4] sm:$0xf]
    %v233 = vld [vmem:[#allocation5 + $0x1e8] sm:$0xf]
    %v234 = vld [vmem:[#allocation5 + $0x1ec] sm:$0xf]
    %v235 = vld [vmem:[#allocation5 + $0x1f0] sm:$0xf]
    %v236 = vld [vmem:[#allocation5 + $0x1f4] sm:$0xf]
    %v237 = vld [vmem:[#allocation5 + $0x1f8] sm:$0xf]
    %v238 = vld [vmem:[#allocation5 + $0x1fc] sm:$0xf]
    %v239 = vld [vmem:[#allocation5 + $0x200] sm:$0xf]
    %v240 = vld [vmem:[#allocation5 + $0x204] sm:$0xf]
    %v241 = vld [vmem:[#allocation5 + $0x208] sm:$0xf]
    %v242 = vld [vmem:[#allocation5 + $0x20c] sm:$0xf]
    %v243 = vld [vmem:[#allocation5 + $0x210] sm:$0xf]
    %v244 = vld [vmem:[#allocation5 + $0x214] sm:$0xf]
    %v245 = vld [vmem:[#allocation5 + $0x218] sm:$0xf]
    %v246 = vld [vmem:[#allocation5 + $0x21c] sm:$0xf]
    %v247 = vld [vmem:[#allocation5 + $0x220] sm:$0xf]
    %v248 = vld [vmem:[#allocation5 + $0x224] sm:$0xf]
    %v249 = vld [vmem:[#allocation5 + $0x228] sm:$0xf]
    %v250 = vld [vmem:[#allocation5 + $0x22c] sm:$0xf]
    %v251 = vld [vmem:[#allocation5 + $0x230] sm:$0xf]
    %v252 = vld [vmem:[#allocation5 + $0x234] sm:$0xf]
    %v253 = vld [vmem:[#allocation5 + $0x238] sm:$0xf]
    %v254 = vld [vmem:[#allocation5 + $0x23c] sm:$0xf]
    %v255 = vld [vmem:[#allocation5 + $0x240] sm:$0xf]
    %v256 = vld [vmem:[#allocation5 + $0x244] sm:$0xf]
    %v257 = vld [vmem:[#allocation5 + $0x248] sm:$0xf]
    %v258 = vld [vmem:[#allocation5 + $0x24c] sm:$0xf]
    %v259 = vld [vmem:[#allocation5 + $0x250] sm:$0xf]
    %v260 = vld [vmem:[#allocation5 + $0x254] sm:$0xf]
    %v261 = vld [vmem:[#allocation5 + $0x258] sm:$0xf]
    %v262 = vld [vmem:[#allocation5 + $0x25c] sm:$0xf]
    %v263 = vld [vmem:[#allocation5 + $0x260] sm:$0xf]
    %v264 = vld [vmem:[#allocation5 + $0x264] sm:$0xf]
    %v265 = vld [vmem:[#allocation5 + $0x268] sm:$0xf]
    %v266 = vld [vmem:[#allocation5 + $0x26c] sm:$0xf]
    %v267 = vld [vmem:[#allocation5 + $0x270] sm:$0xf]
    %v268 = vld [vmem:[#allocation5 + $0x274] sm:$0xf]
    %v269 = vld [vmem:[#allocation5 + $0x278] sm:$0xf]
    %v270 = vld [vmem:[#allocation5 + $0x27c] sm:$0xf]
    %v271 = vld [vmem:[#allocation5 + $0x280] sm:$0xf]
    %v272 = vld [vmem:[#allocation5 + $0x284] sm:$0xf]
    %v273 = vld [vmem:[#allocation5 + $0x288] sm:$0xf]
    %v274 = vld [vmem:[#allocation5 + $0x28c] sm:$0xf]
    %v275 = vld [vmem:[#allocation5 + $0x290] sm:$0xf]
    %v276 = vld [vmem:[#allocation5 + $0x294] sm:$0xf]
    %v277 = vld [vmem:[#allocation5 + $0x298] sm:$0xf]
    %v278 = vld [vmem:[#allocation5 + $0x29c] sm:$0xf]
    %v279 = vld [vmem:[#allocation5 + $0x2a0] sm:$0xf]
    %v280 = vld [vmem:[#allocation5 + $0x2a4] sm:$0xf]
    %v281 = vld [vmem:[#allocation5 + $0x2a8] sm:$0xf]
    %v282 = vld [vmem:[#allocation5 + $0x2ac] sm:$0xf]
    %v283 = vld [vmem:[#allocation5 + $0x2b0] sm:$0xf]
    %v284 = vld [vmem:[#allocation5 + $0x2b4] sm:$0xf]
    %v285 = vld [vmem:[#allocation5 + $0x2b8] sm:$0xf]
    %v286 = vld [vmem:[#allocation5 + $0x2bc] sm:$0xf]
    %v287 = vld [vmem:[#allocation5 + $0x2c0] sm:$0xf]
    %v288 = vld [vmem:[#allocation5 + $0x2c4] sm:$0xf]
    %v289 = vld [vmem:[#allocation5 + $0x2c8] sm:$0xf]
    %v290 = vld [vmem:[#allocation5 + $0x2cc] sm:$0xf]
    %v291 = vld [vmem:[#allocation5 + $0x2d0] sm:$0xf]
    %v292 = vld [vmem:[#allocation5 + $0x2d4] sm:$0xf]
    %v293 = vld [vmem:[#allocation5 + $0x2d8] sm:$0xf]
    %v294 = vld [vmem:[#allocation5 + $0x2dc] sm:$0xf]
    %v295 = vld [vmem:[#allocation5 + $0x2e0] sm:$0xf]
    %v296 = vld [vmem:[#allocation5 + $0x2e4] sm:$0xf]
    %v297 = vld [vmem:[#allocation5 + $0x2e8] sm:$0xf]
    %v298 = vld [vmem:[#allocation5 + $0x2ec] sm:$0xf]
    %v299 = vld [vmem:[#allocation5 + $0x2f0] sm:$0xf]
    %v300 = vld [vmem:[#allocation5 + $0x2f4] sm:$0xf]
    %v301 = vld [vmem:[#allocation5 + $0x2f8] sm:$0xf]
    %v302 = vld [vmem:[#allocation5 + $0x2fc] sm:$0xf]
    %v303 = vld [vmem:[#allocation5 + $0x300] sm:$0xf]
    %v304 = vld [vmem:[#allocation5 + $0x304] sm:$0xf]
    %v305 = vld [vmem:[#allocation5 + $0x308] sm:$0xf]
    %v306 = vld [vmem:[#allocation5 + $0x30c] sm:$0xf]
    %v307 = vld [vmem:[#allocation5 + $0x310] sm:$0xf]
    %v308 = vld [vmem:[#allocation5 + $0x314] sm:$0xf]
    %v309 = vld [vmem:[#allocation5 + $0x318] sm:$0xf]
    %v310 = vld [vmem:[#allocation5 + $0x31c] sm:$0xf]
    %v311 = vld [vmem:[#allocation5 + $0x320] sm:$0xf]
    %v312 = vld [vmem:[#allocation5 + $0x324] sm:$0xf]
    %v313 = vld [vmem:[#allocation5 + $0x328] sm:$0xf]
    %v314 = vld [vmem:[#allocation5 + $0x32c] sm:$0xf]
    %v315 = vld [vmem:[#allocation5 + $0x330] sm:$0xf]
    %v316 = vld [vmem:[#allocation5 + $0x334] sm:$0xf]
    %v317 = vld [vmem:[#allocation5 + $0x338] sm:$0xf]
    %v318 = vld [vmem:[#allocation5 + $0x33c] sm:$0xf]
    %v319 = vld [vmem:[#allocation5 + $0x340] sm:$0xf]
    %v320 = vld [vmem:[#allocation5 + $0x344] sm:$0xf]
    %v321 = vld [vmem:[#allocation5 + $0x348] sm:$0xf]
    %v322 = vld [vmem:[#allocation5 + $0x34c] sm:$0xf]
    %v323 = vld [vmem:[#allocation5 + $0x350] sm:$0xf]
    %v324 = vld [vmem:[#allocation5 + $0x354] sm:$0xf]
    %v325 = vld [vmem:[#allocation5 + $0x358] sm:$0xf]
    %v326 = vld [vmem:[#allocation5 + $0x35c] sm:$0xf]
    %v327 = vld [vmem:[#allocation5 + $0x360] sm:$0xf]
    %v328 = vld [vmem:[#allocation5 + $0x364] sm:$0xf]
    %v329 = vld [vmem:[#allocation5 + $0x368] sm:$0xf]
    %v330 = vld [vmem:[#allocation5 + $0x36c] sm:$0xf]
    %v331 = vld [vmem:[#allocation5 + $0x370] sm:$0xf]
    %v332 = vld [vmem:[#allocation5 + $0x374] sm:$0xf]
    %v333 = vld [vmem:[#allocation5 + $0x378] sm:$0xf]
    %v334 = vld [vmem:[#allocation5 + $0x37c] sm:$0xf]
    %v335 = vld [vmem:[#allocation5 + $0x380] sm:$0xf]
    %v336 = vld [vmem:[#allocation5 + $0x384] sm:$0xf]
    %v337 = vld [vmem:[#allocation5 + $0x388] sm:$0xf]
    %v338 = vld [vmem:[#allocation5 + $0x38c] sm:$0xf]
    %v339 = vld [vmem:[#allocation5 + $0x390] sm:$0xf]
    %v340 = vld [vmem:[#allocation5 + $0x394] sm:$0xf]
    %v341 = vld [vmem:[#allocation5 + $0x398] sm:$0xf]
    %v342 = vld [vmem:[#allocation5 + $0x39c] sm:$0xf]
    %v343 = vld [vmem:[#allocation5 + $0x3a0] sm:$0xf]
    %v344 = vld [vmem:[#allocation5 + $0x3a4] sm:$0xf]
    %v345 = vld [vmem:[#allocation5 + $0x3a8] sm:$0xf]
    %v346 = vld [vmem:[#allocation5 + $0x3ac] sm:$0xf]
    %v347 = vld [vmem:[#allocation5 + $0x3b0] sm:$0xf]
    %v348 = vld [vmem:[#allocation5 + $0x3b4] sm:$0xf]
    %v349 = vld [vmem:[#allocation5 + $0x3b8] sm:$0xf]
    %v350 = vld [vmem:[#allocation5 + $0x3bc] sm:$0xf]
    %v351 = vld [vmem:[#allocation5 + $0x3c0] sm:$0xf]
    %v352 = vld [vmem:[#allocation5 + $0x3c4] sm:$0xf]
    %v353 = vld [vmem:[#allocation5 + $0x3c8] sm:$0xf]
    %v354 = vld [vmem:[#allocation5 + $0x3cc] sm:$0xf]
    %v355 = vld [vmem:[#allocation5 + $0x3d0] sm:$0xf]
    %v356 = vld [vmem:[#allocation5 + $0x3d4] sm:$0xf]
    %v357 = vld [vmem:[#allocation5 + $0x3d8] sm:$0xf]
    %v358 = vld [vmem:[#allocation5 + $0x3dc] sm:$0xf]
    %v359 = vld [vmem:[#allocation5 + $0x3e0] sm:$0xf]
    %v360 = vld [vmem:[#allocation5 + $0x3e4] sm:$0xf]
    %v361 = vld [vmem:[#allocation5 + $0x3e8] sm:$0xf]
    %v362 = vld [vmem:[#allocation5 + $0x3ec] sm:$0xf]
    %v363 = vld [vmem:[#allocation5 + $0x3f0] sm:$0xf]
    %v364 = vld [vmem:[#allocation5 + $0x3f4] sm:$0xf]
    %v365 = vld [vmem:[#allocation5 + $0x3f8] sm:$0xf]
    %v366 = vld [vmem:[#allocation5 + $0x3fc] sm:$0xf]
    %v367 = vld [vmem:[%s2] sm:$0x1]
    %v369 = vlaneseq
    %v370 = vshrl.u32 %v369, 7
    %v371 = vsub.s32 0, %v370
    %v372 = vrot.slane %v367, %v371
    %v630 = vunpack.c.l.b16 %v111
    %v631 = vunpack.c.l.b16 %v112
    %v632 = vunpack.c.l.b16 %v113
    %v633 = vunpack.c.l.b16 %v114
    %v634 = vunpack.c.l.b16 %v115
    %v635 = vunpack.c.l.b16 %v116
    %v636 = vunpack.c.l.b16 %v117
    %v637 = vunpack.c.l.b16 %v118
    %v638 = vunpack.c.l.b16 %v119
    %v639 = vunpack.c.l.b16 %v120
    %v640 = vunpack.c.l.b16 %v121
    %v641 = vunpack.c.l.b16 %v122
    %v642 = vunpack.c.l.b16 %v123
    %v643 = vunpack.c.l.b16 %v124
    %v644 = vunpack.c.l.b16 %v125
    %v645 = vunpack.c.l.b16 %v126
    %v646 = vunpack.c.l.b16 %v127
    %v647 = vunpack.c.l.b16 %v128
    %v648 = vunpack.c.l.b16 %v129
    %v649 = vunpack.c.l.b16 %v130
    %v650 = vunpack.c.l.b16 %v131
    %v651 = vunpack.c.l.b16 %v132
    %v652 = vunpack.c.l.b16 %v133
    %v653 = vunpack.c.l.b16 %v134
    %v654 = vunpack.c.l.b16 %v135
    %v655 = vunpack.c.l.b16 %v136
    %v656 = vunpack.c.l.b16 %v137
    %v657 = vunpack.c.l.b16 %v138
    %v658 = vunpack.c.l.b16 %v139
    %v659 = vunpack.c.l.b16 %v140
    %v660 = vunpack.c.l.b16 %v141
    %v661 = vunpack.c.l.b16 %v142
    %v662 = vunpack.c.l.b16 %v143
    %v663 = vunpack.c.l.b16 %v144
    %v664 = vunpack.c.l.b16 %v145
    %v665 = vunpack.c.l.b16 %v146
    %v666 = vunpack.c.l.b16 %v147
    %v667 = vunpack.c.l.b16 %v148
    %v668 = vunpack.c.l.b16 %v149
    %v669 = vunpack.c.l.b16 %v150
    %v670 = vunpack.c.l.b16 %v151
    %v671 = vunpack.c.l.b16 %v152
    %v672 = vunpack.c.l.b16 %v153
    %v673 = vunpack.c.l.b16 %v154
    %v674 = vunpack.c.l.b16 %v155
    %v675 = vunpack.c.l.b16 %v156
    %v676 = vunpack.c.l.b16 %v157
    %v677 = vunpack.c.l.b16 %v158
    %v678 = vunpack.c.l.b16 %v159
    %v679 = vunpack.c.l.b16 %v160
    %v680 = vunpack.c.l.b16 %v161
    %v681 = vunpack.c.l.b16 %v162
    %v682 = vunpack.c.l.b16 %v163
    %v683 = vunpack.c.l.b16 %v164
    %v684 = vunpack.c.l.b16 %v165
    %v685 = vunpack.c.l.b16 %v166
    %v686 = vunpack.c.l.b16 %v167
    %v687 = vunpack.c.l.b16 %v168
    %v688 = vunpack.c.l.b16 %v169
    %v689 = vunpack.c.l.b16 %v170
    %v690 = vunpack.c.l.b16 %v171
    %v691 = vunpack.c.l.b16 %v172
    %v692 = vunpack.c.l.b16 %v173
    %v693 = vunpack.c.l.b16 %v174
    %v694 = vunpack.c.l.b16 %v175
    %v695 = vunpack.c.l.b16 %v176
    %v696 = vunpack.c.l.b16 %v177
    %v697 = vunpack.c.l.b16 %v178
    %v698 = vunpack.c.l.b16 %v179
    %v699 = vunpack.c.l.b16 %v180
    %v700 = vunpack.c.l.b16 %v181
    %v701 = vunpack.c.l.b16 %v182
    %v702 = vunpack.c.l.b16 %v183
    %v703 = vunpack.c.l.b16 %v184
    %v704 = vunpack.c.l.b16 %v185
    %v705 = vunpack.c.l.b16 %v186
    %v706 = vunpack.c.l.b16 %v187
    %v707 = vunpack.c.l.b16 %v188
    %v708 = vunpack.c.l.b16 %v189
    %v709 = vunpack.c.l.b16 %v190
    %v710 = vunpack.c.l.b16 %v191
    %v711 = vunpack.c.l.b16 %v192
    %v712 = vunpack.c.l.b16 %v193
    %v713 = vunpack.c.l.b16 %v194
    %v714 = vunpack.c.l.b16 %v195
    %v715 = vunpack.c.l.b16 %v196
    %v716 = vunpack.c.l.b16 %v197
    %v717 = vunpack.c.l.b16 %v198
    %v718 = vunpack.c.l.b16 %v199
    %v719 = vunpack.c.l.b16 %v200
    %v720 = vunpack.c.l.b16 %v201
    %v721 = vunpack.c.l.b16 %v202
    %v722 = vunpack.c.l.b16 %v203
    %v723 = vunpack.c.l.b16 %v204
    %v724 = vunpack.c.l.b16 %v205
    %v725 = vunpack.c.l.b16 %v206
    %v726 = vunpack.c.l.b16 %v207
    %v727 = vunpack.c.l.b16 %v208
    %v728 = vunpack.c.l.b16 %v209
    %v729 = vunpack.c.l.b16 %v210
    %v730 = vunpack.c.l.b16 %v211
    %v731 = vunpack.c.l.b16 %v212
    %v732 = vunpack.c.l.b16 %v213
    %v733 = vunpack.c.l.b16 %v214
    %v734 = vunpack.c.l.b16 %v215
    %v735 = vunpack.c.l.b16 %v216
    %v736 = vunpack.c.l.b16 %v217
    %v737 = vunpack.c.l.b16 %v218
    %v738 = vunpack.c.l.b16 %v219
    %v739 = vunpack.c.l.b16 %v220
    %v740 = vunpack.c.l.b16 %v221
    %v741 = vunpack.c.l.b16 %v222
    %v742 = vunpack.c.l.b16 %v223
    %v743 = vunpack.c.l.b16 %v224
    %v744 = vunpack.c.l.b16 %v225
    %v745 = vunpack.c.l.b16 %v226
    %v746 = vunpack.c.l.b16 %v227
    %v747 = vunpack.c.l.b16 %v228
    %v748 = vunpack.c.l.b16 %v229
    %v749 = vunpack.c.l.b16 %v230
    %v750 = vunpack.c.l.b16 %v231
    %v751 = vunpack.c.l.b16 %v232
    %v752 = vunpack.c.l.b16 %v233
    %v753 = vunpack.c.l.b16 %v234
    %v754 = vunpack.c.l.b16 %v235
    %v755 = vunpack.c.l.b16 %v236
    %v756 = vunpack.c.l.b16 %v237
    %v757 = vunpack.c.l.b16 %v238
    %v758 = vunpack.c.l.b16 %v239
    %v759 = vunpack.c.l.b16 %v240
    %v760 = vunpack.c.l.b16 %v241
    %v761 = vunpack.c.l.b16 %v242
    %v762 = vunpack.c.l.b16 %v243
    %v763 = vunpack.c.l.b16 %v244
    %v764 = vunpack.c.l.b16 %v245
    %v765 = vunpack.c.l.b16 %v246
    %v766 = vunpack.c.l.b16 %v247
    %v767 = vunpack.c.l.b16 %v248
    %v768 = vunpack.c.l.b16 %v249
    %v769 = vunpack.c.l.b16 %v250
    %v770 = vunpack.c.l.b16 %v251
    %v771 = vunpack.c.l.b16 %v252
    %v772 = vunpack.c.l.b16 %v253
    %v773 = vunpack.c.l.b16 %v254
    %v774 = vunpack.c.l.b16 %v255
    %v775 = vunpack.c.l.b16 %v256
    %v776 = vunpack.c.l.b16 %v257
    %v777 = vunpack.c.l.b16 %v258
    %v778 = vunpack.c.l.b16 %v259
    %v779 = vunpack.c.l.b16 %v260
    %v780 = vunpack.c.l.b16 %v261
    %v781 = vunpack.c.l.b16 %v262
    %v782 = vunpack.c.l.b16 %v263
    %v783 = vunpack.c.l.b16 %v264
    %v784 = vunpack.c.l.b16 %v265
    %v785 = vunpack.c.l.b16 %v266
    %v786 = vunpack.c.l.b16 %v267
    %v787 = vunpack.c.l.b16 %v268
    %v788 = vunpack.c.l.b16 %v269
    %v789 = vunpack.c.l.b16 %v270
    %v790 = vunpack.c.l.b16 %v271
    %v791 = vunpack.c.l.b16 %v272
    %v792 = vunpack.c.l.b16 %v273
    %v793 = vunpack.c.l.b16 %v274
    %v794 = vunpack.c.l.b16 %v275
    %v795 = vunpack.c.l.b16 %v276
    %v796 = vunpack.c.l.b16 %v277
    %v797 = vunpack.c.l.b16 %v278
    %v798 = vunpack.c.l.b16 %v279
    %v799 = vunpack.c.l.b16 %v280
    %v800 = vunpack.c.l.b16 %v281
    %v801 = vunpack.c.l.b16 %v282
    %v802 = vunpack.c.l.b16 %v283
    %v803 = vunpack.c.l.b16 %v284
    %v804 = vunpack.c.l.b16 %v285
    %v805 = vunpack.c.l.b16 %v286
    %v806 = vunpack.c.l.b16 %v287
    %v807 = vunpack.c.l.b16 %v288
    %v808 = vunpack.c.l.b16 %v289
    %v809 = vunpack.c.l.b16 %v290
    %v810 = vunpack.c.l.b16 %v291
    %v811 = vunpack.c.l.b16 %v292
    %v812 = vunpack.c.l.b16 %v293
    %v813 = vunpack.c.l.b16 %v294
    %v814 = vunpack.c.l.b16 %v295
    %v815 = vunpack.c.l.b16 %v296
    %v816 = vunpack.c.l.b16 %v297
    %v817 = vunpack.c.l.b16 %v298
    %v818 = vunpack.c.l.b16 %v299
    %v819 = vunpack.c.l.b16 %v300
    %v820 = vunpack.c.l.b16 %v301
    %v821 = vunpack.c.l.b16 %v302
    %v822 = vunpack.c.l.b16 %v303
    %v823 = vunpack.c.l.b16 %v304
    %v824 = vunpack.c.l.b16 %v305
    %v825 = vunpack.c.l.b16 %v306
    %v826 = vunpack.c.l.b16 %v307
    %v827 = vunpack.c.l.b16 %v308
    %v828 = vunpack.c.l.b16 %v309
    %v829 = vunpack.c.l.b16 %v310
    %v830 = vunpack.c.l.b16 %v311
    %v831 = vunpack.c.l.b16 %v312
    %v832 = vunpack.c.l.b16 %v313
    %v833 = vunpack.c.l.b16 %v314
    %v834 = vunpack.c.l.b16 %v315
    %v835 = vunpack.c.l.b16 %v316
    %v836 = vunpack.c.l.b16 %v317
    %v837 = vunpack.c.l.b16 %v318
    %v838 = vunpack.c.l.b16 %v319
    %v839 = vunpack.c.l.b16 %v320
    %v840 = vunpack.c.l.b16 %v321
    %v841 = vunpack.c.l.b16 %v322
    %v842 = vunpack.c.l.b16 %v323
    %v843 = vunpack.c.l.b16 %v324
    %v844 = vunpack.c.l.b16 %v325
    %v845 = vunpack.c.l.b16 %v326
    %v846 = vunpack.c.l.b16 %v327
    %v847 = vunpack.c.l.b16 %v328
    %v848 = vunpack.c.l.b16 %v329
    %v849 = vunpack.c.l.b16 %v330
    %v850 = vunpack.c.l.b16 %v331
    %v851 = vunpack.c.l.b16 %v332
    %v852 = vunpack.c.l.b16 %v333
    %v853 = vunpack.c.l.b16 %v334
    %v854 = vunpack.c.l.b16 %v335
    %v855 = vunpack.c.l.b16 %v336
    %v856 = vunpack.c.l.b16 %v337
    %v857 = vunpack.c.l.b16 %v338
    %v858 = vunpack.c.l.b16 %v339
    %v859 = vunpack.c.l.b16 %v340
    %v860 = vunpack.c.l.b16 %v341
    %v861 = vunpack.c.l.b16 %v342
    %v862 = vunpack.c.l.b16 %v343
    %v863 = vunpack.c.l.b16 %v344
    %v864 = vunpack.c.l.b16 %v345
    %v865 = vunpack.c.l.b16 %v346
    %v866 = vunpack.c.l.b16 %v347
    %v867 = vunpack.c.l.b16 %v348
    %v868 = vunpack.c.l.b16 %v349
    %v869 = vunpack.c.l.b16 %v350
    %v870 = vunpack.c.l.b16 %v351
    %v871 = vunpack.c.l.b16 %v352
    %v872 = vunpack.c.l.b16 %v353
    %v873 = vunpack.c.l.b16 %v354
    %v874 = vunpack.c.l.b16 %v355
    %v875 = vunpack.c.l.b16 %v356
    %v876 = vunpack.c.l.b16 %v357
    %v877 = vunpack.c.l.b16 %v358
    %v878 = vunpack.c.l.b16 %v359
    %v879 = vunpack.c.l.b16 %v360
    %v880 = vunpack.c.l.b16 %v361
    %v881 = vunpack.c.l.b16 %v362
    %v882 = vunpack.c.l.b16 %v363
    %v883 = vunpack.c.l.b16 %v364
    %v884 = vunpack.c.l.b16 %v365
    %v885 = vunpack.c.l.b16 %v366
    %v886 = vpack.c.b16 %v631, %v630
    %v887 = vpack.c.b16 %v633, %v632
    %v888 = vpack.c.b16 %v635, %v634
    %v889 = vpack.c.b16 %v637, %v636
    %v890 = vpack.c.b16 %v639, %v638
    %v891 = vpack.c.b16 %v641, %v640
    %v892 = vpack.c.b16 %v643, %v642
    %v893 = vpack.c.b16 %v645, %v644
    %v894 = vpack.c.b16 %v647, %v646
    %v895 = vpack.c.b16 %v649, %v648
    %v896 = vpack.c.b16 %v651, %v650
    %v897 = vpack.c.b16 %v653, %v652
    %v898 = vpack.c.b16 %v655, %v654
    %v899 = vpack.c.b16 %v657, %v656
    %v900 = vpack.c.b16 %v659, %v658
    %v901 = vpack.c.b16 %v661, %v660
    %v902 = vpack.c.b16 %v663, %v662
    %v903 = vpack.c.b16 %v665, %v664
    %v904 = vpack.c.b16 %v667, %v666
    %v905 = vpack.c.b16 %v669, %v668
    %v906 = vpack.c.b16 %v671, %v670
    %v907 = vpack.c.b16 %v673, %v672
    %v908 = vpack.c.b16 %v675, %v674
    %v909 = vpack.c.b16 %v677, %v676
    %v910 = vpack.c.b16 %v679, %v678
    %v911 = vpack.c.b16 %v681, %v680
    %v912 = vpack.c.b16 %v683, %v682
    %v913 = vpack.c.b16 %v685, %v684
    %v914 = vpack.c.b16 %v687, %v686
    %v915 = vpack.c.b16 %v689, %v688
    %v916 = vpack.c.b16 %v691, %v690
    %v917 = vpack.c.b16 %v693, %v692
    %v918 = vpack.c.b16 %v695, %v694
    %v919 = vpack.c.b16 %v697, %v696
    %v920 = vpack.c.b16 %v699, %v698
    %v921 = vpack.c.b16 %v701, %v700
    %v922 = vpack.c.b16 %v703, %v702
    %v923 = vpack.c.b16 %v705, %v704
    %v924 = vpack.c.b16 %v707, %v706
    %v925 = vpack.c.b16 %v709, %v708
    %v926 = vpack.c.b16 %v711, %v710
    %v927 = vpack.c.b16 %v713, %v712
    %v928 = vpack.c.b16 %v715, %v714
    %v929 = vpack.c.b16 %v717, %v716
    %v930 = vpack.c.b16 %v719, %v718
    %v931 = vpack.c.b16 %v721, %v720
    %v932 = vpack.c.b16 %v723, %v722
    %v933 = vpack.c.b16 %v725, %v724
    %v934 = vpack.c.b16 %v727, %v726
    %v935 = vpack.c.b16 %v729, %v728
    %v936 = vpack.c.b16 %v731, %v730
    %v937 = vpack.c.b16 %v733, %v732
    %v938 = vpack.c.b16 %v735, %v734
    %v939 = vpack.c.b16 %v737, %v736
    %v940 = vpack.c.b16 %v739, %v738
    %v941 = vpack.c.b16 %v741, %v740
    %v942 = vpack.c.b16 %v743, %v742
    %v943 = vpack.c.b16 %v745, %v744
    %v944 = vpack.c.b16 %v747, %v746
    %v945 = vpack.c.b16 %v749, %v748
    %v946 = vpack.c.b16 %v751, %v750
    %v947 = vpack.c.b16 %v753, %v752
    %v948 = vpack.c.b16 %v755, %v754
    %v949 = vpack.c.b16 %v757, %v756
    %v950 = vpack.c.b16 %v759, %v758
    %v951 = vpack.c.b16 %v761, %v760
    %v952 = vpack.c.b16 %v763, %v762
    %v953 = vpack.c.b16 %v765, %v764
    %v954 = vpack.c.b16 %v767, %v766
    %v955 = vpack.c.b16 %v769, %v768
    %v956 = vpack.c.b16 %v771, %v770
    %v957 = vpack.c.b16 %v773, %v772
    %v958 = vpack.c.b16 %v775, %v774
    %v959 = vpack.c.b16 %v777, %v776
    %v960 = vpack.c.b16 %v779, %v778
    %v961 = vpack.c.b16 %v781, %v780
    %v962 = vpack.c.b16 %v783, %v782
    %v963 = vpack.c.b16 %v785, %v784
    %v964 = vpack.c.b16 %v787, %v786
    %v965 = vpack.c.b16 %v789, %v788
    %v966 = vpack.c.b16 %v791, %v790
    %v967 = vpack.c.b16 %v793, %v792
    %v968 = vpack.c.b16 %v795, %v794
    %v969 = vpack.c.b16 %v797, %v796
    %v970 = vpack.c.b16 %v799, %v798
    %v971 = vpack.c.b16 %v801, %v800
    %v972 = vpack.c.b16 %v803, %v802
    %v973 = vpack.c.b16 %v805, %v804
    %v974 = vpack.c.b16 %v807, %v806
    %v975 = vpack.c.b16 %v809, %v808
    %v976 = vpack.c.b16 %v811, %v810
    %v977 = vpack.c.b16 %v813, %v812
    %v978 = vpack.c.b16 %v815, %v814
    %v979 = vpack.c.b16 %v817, %v816
    %v980 = vpack.c.b16 %v819, %v818
    %v981 = vpack.c.b16 %v821, %v820
    %v982 = vpack.c.b16 %v823, %v822
    %v983 = vpack.c.b16 %v825, %v824
    %v984 = vpack.c.b16 %v827, %v826
    %v985 = vpack.c.b16 %v829, %v828
    %v986 = vpack.c.b16 %v831, %v830
    %v987 = vpack.c.b16 %v833, %v832
    %v988 = vpack.c.b16 %v835, %v834
    %v989 = vpack.c.b16 %v837, %v836
    %v990 = vpack.c.b16 %v839, %v838
    %v991 = vpack.c.b16 %v841, %v840
    %v992 = vpack.c.b16 %v843, %v842
    %v993 = vpack.c.b16 %v845, %v844
    %v994 = vpack.c.b16 %v847, %v846
    %v995 = vpack.c.b16 %v849, %v848
    %v996 = vpack.c.b16 %v851, %v850
    %v997 = vpack.c.b16 %v853, %v852
    %v998 = vpack.c.b16 %v855, %v854
    %v999 = vpack.c.b16 %v857, %v856
    %v1000 = vpack.c.b16 %v859, %v858
    %v1001 = vpack.c.b16 %v861, %v860
    %v1002 = vpack.c.b16 %v863, %v862
    %v1003 = vpack.c.b16 %v865, %v864
    %v1004 = vpack.c.b16 %v867, %v866
    %v1005 = vpack.c.b16 %v869, %v868
    %v1006 = vpack.c.b16 %v871, %v870
    %v1007 = vpack.c.b16 %v873, %v872
    %v1008 = vpack.c.b16 %v875, %v874
    %v1009 = vpack.c.b16 %v877, %v876
    %v1010 = vpack.c.b16 %v879, %v878
    %v1011 = vpack.c.b16 %v881, %v880
    %v1012 = vpack.c.b16 %v883, %v882
    %v1013 = vpack.c.b16 %v885, %v884
    %1142 = vmatprep.subr.bf16.mxu0 0
    %1143 = vmatpush1.bf16.msra.mxu0 %v886
    %1144 = vmatprep.subr.bf16.mxu0 0
    %1145 = vmatpush1.bf16.msra.mxu0 %v887
    %1146 = vmatprep.subr.bf16.mxu0 0
    %1147 = vmatpush1.bf16.msra.mxu0 %v888
    %1148 = vmatprep.subr.bf16.mxu0 0
    %1149 = vmatpush1.bf16.msra.mxu0 %v889
    %1150 = vmatprep.subr.bf16.mxu0 0
    %1151 = vmatpush1.bf16.msra.mxu0 %v890
    %1152 = vmatprep.subr.bf16.mxu0 0
    %1153 = vmatpush1.bf16.msra.mxu0 %v891
    %1154 = vmatprep.subr.bf16.mxu0 0
    %1155 = vmatpush1.bf16.msra.mxu0 %v892
    %1156 = vmatprep.subr.bf16.mxu0 0
    %1157 = vmatpush1.bf16.msra.mxu0 %v893
    %1158 = vmatprep.subr.bf16.mxu0 0
    %1159 = vmatpush1.bf16.msra.mxu0 %v894
    %1160 = vmatprep.subr.bf16.mxu0 0
    %1161 = vmatpush1.bf16.msra.mxu0 %v895
    %1162 = vmatprep.subr.bf16.mxu0 0
    %1163 = vmatpush1.bf16.msra.mxu0 %v896
    %1164 = vmatprep.subr.bf16.mxu0 0
    %1165 = vmatpush1.bf16.msra.mxu0 %v897
    %1166 = vmatprep.subr.bf16.mxu0 0
    %1167 = vmatpush1.bf16.msra.mxu0 %v898
    %1168 = vmatprep.subr.bf16.mxu0 0
    %1169 = vmatpush1.bf16.msra.mxu0 %v899
    %1170 = vmatprep.subr.bf16.mxu0 0
    %1171 = vmatpush1.bf16.msra.mxu0 %v900
    %1172 = vmatprep.subr.bf16.mxu0 0
    %1173 = vmatpush1.bf16.msra.mxu0 %v901
    %1174 = vmatprep.mubr.bf16.mxu0 %v96
    %1175 = vmatmul.mubr.bf16.gmra.mrb[0].mxu0 %v95
    %v1176 = vpop.f32.mrb[0].mxu0
    %v1177 = vadd.f32 %v372, %v1176
    %v1178 = vpop.f32.mrb[0].mxu0
    %v1179 = vpop.f32.mrb[0].mxu0
    %v1180 = vadd.f32 %v372, %v1179
    %v1181 = vpop.f32.mrb[0].mxu0
    %1182 = vdwg.mxu0
    %1183 = vmatprep.subr.bf16.mxu0 0
    %1184 = vmatpush1.bf16.msra.mxu0 %v902
    %1185 = vmatprep.subr.bf16.mxu0 0
    %1186 = vmatpush1.bf16.msra.mxu0 %v903
    %1187 = vmatprep.subr.bf16.mxu0 0
    %1188 = vmatpush1.bf16.msra.mxu0 %v904
    %1189 = vmatprep.subr.bf16.mxu0 0
    %1190 = vmatpush1.bf16.msra.mxu0 %v905
    %1191 = vmatprep.subr.bf16.mxu0 0
    %1192 = vmatpush1.bf16.msra.mxu0 %v906
    %1193 = vmatprep.subr.bf16.mxu0 0
    %1194 = vmatpush1.bf16.msra.mxu0 %v907
    %1195 = vmatprep.subr.bf16.mxu0 0
    %1196 = vmatpush1.bf16.msra.mxu0 %v908
    %1197 = vmatprep.subr.bf16.mxu0 0
    %1198 = vmatpush1.bf16.msra.mxu0 %v909
    %1199 = vmatprep.subr.bf16.mxu0 0
    %1200 = vmatpush1.bf16.msra.mxu0 %v910
    %1201 = vmatprep.subr.bf16.mxu0 0
    %1202 = vmatpush1.bf16.msra.mxu0 %v911
    %1203 = vmatprep.subr.bf16.mxu0 0
    %1204 = vmatpush1.bf16.msra.mxu0 %v912
    %1205 = vmatprep.subr.bf16.mxu0 0
    %1206 = vmatpush1.bf16.msra.mxu0 %v913
    %1207 = vmatprep.subr.bf16.mxu0 0
    %1208 = vmatpush1.bf16.msra.mxu0 %v914
    %1209 = vmatprep.subr.bf16.mxu0 0
    %1210 = vmatpush1.bf16.msra.mxu0 %v915
    %1211 = vmatprep.subr.bf16.mxu0 0
    %1212 = vmatpush1.bf16.msra.mxu0 %v916
    %1213 = vmatprep.subr.bf16.mxu0 0
    %1214 = vmatpush1.bf16.msra.mxu0 %v917
    %1215 = vmatprep.mubr.bf16.mxu0 %v98
    %1216 = vmatmul.mubr.bf16.gmra.mrb[0].mxu0 %v97
    %v1217 = vpop.f32.mrb[0].mxu0
    %v1218 = vadd.f32 %v1177, %v1217
    %v1219 = vpop.f32.mrb[0].mxu0
    %v1220 = vpop.f32.mrb[0].mxu0
    %v1221 = vadd.f32 %v1180, %v1220
    %v1222 = vpop.f32.mrb[0].mxu0
    %1223 = vdwg.mxu0
    %1224 = vmatprep.subr.bf16.mxu0 0
    %1225 = vmatpush1.bf16.msra.mxu0 %v918
    %1226 = vmatprep.subr.bf16.mxu0 0
    %1227 = vmatpush1.bf16.msra.mxu0 %v919
    %1228 = vmatprep.subr.bf16.mxu0 0
    %1229 = vmatpush1.bf16.msra.mxu0 %v920
    %1230 = vmatprep.subr.bf16.mxu0 0
    %1231 = vmatpush1.bf16.msra.mxu0 %v921
    %1232 = vmatprep.subr.bf16.mxu0 0
    %1233 = vmatpush1.bf16.msra.mxu0 %v922
    %1234 = vmatprep.subr.bf16.mxu0 0
    %1235 = vmatpush1.bf16.msra.mxu0 %v923
    %1236 = vmatprep.subr.bf16.mxu0 0
    %1237 = vmatpush1.bf16.msra.mxu0 %v924
    %1238 = vmatprep.subr.bf16.mxu0 0
    %1239 = vmatpush1.bf16.msra.mxu0 %v925
    %1240 = vmatprep.subr.bf16.mxu0 0
    %1241 = vmatpush1.bf16.msra.mxu0 %v926
    %1242 = vmatprep.subr.bf16.mxu0 0
    %1243 = vmatpush1.bf16.msra.mxu0 %v927
    %1244 = vmatprep.subr.bf16.mxu0 0
    %1245 = vmatpush1.bf16.msra.mxu0 %v928
    %1246 = vmatprep.subr.bf16.mxu0 0
    %1247 = vmatpush1.bf16.msra.mxu0 %v929
    %1248 = vmatprep.subr.bf16.mxu0 0
    %1249 = vmatpush1.bf16.msra.mxu0 %v930
    %1250 = vmatprep.subr.bf16.mxu0 0
    %1251 = vmatpush1.bf16.msra.mxu0 %v931
    %1252 = vmatprep.subr.bf16.mxu0 0
    %1253 = vmatpush1.bf16.msra.mxu0 %v932
    %1254 = vmatprep.subr.bf16.mxu0 0
    %1255 = vmatpush1.bf16.msra.mxu0 %v933
    %1256 = vmatprep.mubr.bf16.mxu0 %v100
    %1257 = vmatmul.mubr.bf16.gmra.mrb[0].mxu0 %v99
    %v1258 = vpop.f32.mrb[0].mxu0
    %v1259 = vadd.f32 %v1218, %v1258
    %v1260 = vpop.f32.mrb[0].mxu0
    %v1261 = vpop.f32.mrb[0].mxu0
    %v1262 = vadd.f32 %v1221, %v1261
    %v1263 = vpop.f32.mrb[0].mxu0
    %1264 = vdwg.mxu0
    %1265 = vmatprep.subr.bf16.mxu0 0
    %1266 = vmatpush1.bf16.msra.mxu0 %v934
    %1267 = vmatprep.subr.bf16.mxu0 0
    %1268 = vmatpush1.bf16.msra.mxu0 %v935
    %1269 = vmatprep.subr.bf16.mxu0 0
    %1270 = vmatpush1.bf16.msra.mxu0 %v936
    %1271 = vmatprep.subr.bf16.mxu0 0
    %1272 = vmatpush1.bf16.msra.mxu0 %v937
    %1273 = vmatprep.subr.bf16.mxu0 0
    %1274 = vmatpush1.bf16.msra.mxu0 %v938
    %1275 = vmatprep.subr.bf16.mxu0 0
    %1276 = vmatpush1.bf16.msra.mxu0 %v939
    %1277 = vmatprep.subr.bf16.mxu0 0
    %1278 = vmatpush1.bf16.msra.mxu0 %v940
    %1279 = vmatprep.subr.bf16.mxu0 0
    %1280 = vmatpush1.bf16.msra.mxu0 %v941
    %1281 = vmatprep.subr.bf16.mxu0 0
    %1282 = vmatpush1.bf16.msra.mxu0 %v942
    %1283 = vmatprep.subr.bf16.mxu0 0
    %1284 = vmatpush1.bf16.msra.mxu0 %v943
    %1285 = vmatprep.subr.bf16.mxu0 0
    %1286 = vmatpush1.bf16.msra.mxu0 %v944
    %1287 = vmatprep.subr.bf16.mxu0 0
    %1288 = vmatpush1.bf16.msra.mxu0 %v945
    %1289 = vmatprep.subr.bf16.mxu0 0
    %1290 = vmatpush1.bf16.msra.mxu0 %v946
    %1291 = vmatprep.subr.bf16.mxu0 0
    %1292 = vmatpush1.bf16.msra.mxu0 %v947
    %1293 = vmatprep.subr.bf16.mxu0 0
    %1294 = vmatpush1.bf16.msra.mxu0 %v948
    %1295 = vmatprep.subr.bf16.mxu0 0
    %1296 = vmatpush1.bf16.msra.mxu0 %v949
    %1297 = vmatprep.mubr.bf16.mxu0 %v102
    %1298 = vmatmul.mubr.bf16.gmra.mrb[0].mxu0 %v101
    %v1299 = vpop.f32.mrb[0].mxu0
    %v1300 = vadd.f32 %v1259, %v1299
    %v1301 = vpop.f32.mrb[0].mxu0
    %v1302 = vpop.f32.mrb[0].mxu0
    %v1303 = vadd.f32 %v1262, %v1302
    %v1304 = vpop.f32.mrb[0].mxu0
    %1305 = vdwg.mxu0
    %1306 = vmatprep.subr.bf16.mxu0 0
    %1307 = vmatpush1.bf16.msra.mxu0 %v950
    %1308 = vmatprep.subr.bf16.mxu0 0
    %1309 = vmatpush1.bf16.msra.mxu0 %v951
    %1310 = vmatprep.subr.bf16.mxu0 0
    %1311 = vmatpush1.bf16.msra.mxu0 %v952
    %1312 = vmatprep.subr.bf16.mxu0 0
    %1313 = vmatpush1.bf16.msra.mxu0 %v953
    %1314 = vmatprep.subr.bf16.mxu0 0
    %1315 = vmatpush1.bf16.msra.mxu0 %v954
    %1316 = vmatprep.subr.bf16.mxu0 0
    %1317 = vmatpush1.bf16.msra.mxu0 %v955
    %1318 = vmatprep.subr.bf16.mxu0 0
    %1319 = vmatpush1.bf16.msra.mxu0 %v956
    %1320 = vmatprep.subr.bf16.mxu0 0
    %1321 = vmatpush1.bf16.msra.mxu0 %v957
    %1322 = vmatprep.subr.bf16.mxu0 0
    %1323 = vmatpush1.bf16.msra.mxu0 %v958
    %1324 = vmatprep.subr.bf16.mxu0 0
    %1325 = vmatpush1.bf16.msra.mxu0 %v959
    %1326 = vmatprep.subr.bf16.mxu0 0
    %1327 = vmatpush1.bf16.msra.mxu0 %v960
    %1328 = vmatprep.subr.bf16.mxu0 0
    %1329 = vmatpush1.bf16.msra.mxu0 %v961
    %1330 = vmatprep.subr.bf16.mxu0 0
    %1331 = vmatpush1.bf16.msra.mxu0 %v962
    %1332 = vmatprep.subr.bf16.mxu0 0
    %1333 = vmatpush1.bf16.msra.mxu0 %v963
    %1334 = vmatprep.subr.bf16.mxu0 0
    %1335 = vmatpush1.bf16.msra.mxu0 %v964
    %1336 = vmatprep.subr.bf16.mxu0 0
    %1337 = vmatpush1.bf16.msra.mxu0 %v965
    %1338 = vmatprep.mubr.bf16.mxu0 %v104
    %1339 = vmatmul.mubr.bf16.gmra.mrb[0].mxu0 %v103
    %v1340 = vpop.f32.mrb[0].mxu0
    %v1341 = vadd.f32 %v1300, %v1340
    %v1342 = vpop.f32.mrb[0].mxu0
    %v1343 = vpop.f32.mrb[0].mxu0
    %v1344 = vadd.f32 %v1303, %v1343
    %v1345 = vpop.f32.mrb[0].mxu0
    %1346 = vdwg.mxu0
    %1347 = vmatprep.subr.bf16.mxu0 0
    %1348 = vmatpush1.bf16.msra.mxu0 %v966
    %1349 = vmatprep.subr.bf16.mxu0 0
    %1350 = vmatpush1.bf16.msra.mxu0 %v967
    %1351 = vmatprep.subr.bf16.mxu0 0
    %1352 = vmatpush1.bf16.msra.mxu0 %v968
    %1353 = vmatprep.subr.bf16.mxu0 0
    %1354 = vmatpush1.bf16.msra.mxu0 %v969
    %1355 = vmatprep.subr.bf16.mxu0 0
    %1356 = vmatpush1.bf16.msra.mxu0 %v970
    %1357 = vmatprep.subr.bf16.mxu0 0
    %1358 = vmatpush1.bf16.msra.mxu0 %v971
    %1359 = vmatprep.subr.bf16.mxu0 0
    %1360 = vmatpush1.bf16.msra.mxu0 %v972
    %1361 = vmatprep.subr.bf16.mxu0 0
    %1362 = vmatpush1.bf16.msra.mxu0 %v973
    %1363 = vmatprep.subr.bf16.mxu0 0
    %1364 = vmatpush1.bf16.msra.mxu0 %v974
    %1365 = vmatprep.subr.bf16.mxu0 0
    %1366 = vmatpush1.bf16.msra.mxu0 %v975
    %1367 = vmatprep.subr.bf16.mxu0 0
    %1368 = vmatpush1.bf16.msra.mxu0 %v976
    %1369 = vmatprep.subr.bf16.mxu0 0
    %1370 = vmatpush1.bf16.msra.mxu0 %v977
    %1371 = vmatprep.subr.bf16.mxu0 0
    %1372 = vmatpush1.bf16.msra.mxu0 %v978
    %1373 = vmatprep.subr.bf16.mxu0 0
    %1374 = vmatpush1.bf16.msra.mxu0 %v979
    %1375 = vmatprep.subr.bf16.mxu0 0
    %1376 = vmatpush1.bf16.msra.mxu0 %v980
    %1377 = vmatprep.subr.bf16.mxu0 0
    %1378 = vmatpush1.bf16.msra.mxu0 %v981
    %1379 = vmatprep.mubr.bf16.mxu0 %v106
    %1380 = vmatmul.mubr.bf16.gmra.mrb[0].mxu0 %v105
    %v1381 = vpop.f32.mrb[0].mxu0
    %v1382 = vadd.f32 %v1341, %v1381
    %v1383 = vpop.f32.mrb[0].mxu0
    %v1384 = vpop.f32.mrb[0].mxu0
    %v1385 = vadd.f32 %v1344, %v1384
    %v1386 = vpop.f32.mrb[0].mxu0
    %1387 = vdwg.mxu0
    %1388 = vmatprep.subr.bf16.mxu0 0
    %1389 = vmatpush1.bf16.msra.mxu0 %v982
    %1390 = vmatprep.subr.bf16.mxu0 0
    %1391 = vmatpush1.bf16.msra.mxu0 %v983
    %1392 = vmatprep.subr.bf16.mxu0 0
    %1393 = vmatpush1.bf16.msra.mxu0 %v984
    %1394 = vmatprep.subr.bf16.mxu0 0
    %1395 = vmatpush1.bf16.msra.mxu0 %v985
    %1396 = vmatprep.subr.bf16.mxu0 0
    %1397 = vmatpush1.bf16.msra.mxu0 %v986
    %1398 = vmatprep.subr.bf16.mxu0 0
    %1399 = vmatpush1.bf16.msra.mxu0 %v987
    %1400 = vmatprep.subr.bf16.mxu0 0
    %1401 = vmatpush1.bf16.msra.mxu0 %v988
    %1402 = vmatprep.subr.bf16.mxu0 0
    %1403 = vmatpush1.bf16.msra.mxu0 %v989
    %1404 = vmatprep.subr.bf16.mxu0 0
    %1405 = vmatpush1.bf16.msra.mxu0 %v990
    %1406 = vmatprep.subr.bf16.mxu0 0
    %1407 = vmatpush1.bf16.msra.mxu0 %v991
    %1408 = vmatprep.subr.bf16.mxu0 0
    %1409 = vmatpush1.bf16.msra.mxu0 %v992
    %1410 = vmatprep.subr.bf16.mxu0 0
    %1411 = vmatpush1.bf16.msra.mxu0 %v993
    %1412 = vmatprep.subr.bf16.mxu0 0
    %1413 = vmatpush1.bf16.msra.mxu0 %v994
    %1414 = vmatprep.subr.bf16.mxu0 0
    %1415 = vmatpush1.bf16.msra.mxu0 %v995
    %1416 = vmatprep.subr.bf16.mxu0 0
    %1417 = vmatpush1.bf16.msra.mxu0 %v996
    %1418 = vmatprep.subr.bf16.mxu0 0
    %1419 = vmatpush1.bf16.msra.mxu0 %v997
    %1420 = vmatprep.mubr.bf16.mxu0 %v108
    %1421 = vmatmul.mubr.bf16.gmra.mrb[0].mxu0 %v107
    %v1422 = vpop.f32.mrb[0].mxu0
    %v1423 = vadd.f32 %v1382, %v1422
    %v1424 = vpop.f32.mrb[0].mxu0
    %v1425 = vpop.f32.mrb[0].mxu0
    %v1426 = vadd.f32 %v1385, %v1425
    %v1427 = vpop.f32.mrb[0].mxu0
    %1428 = vdwg.mxu0
    %1429 = vmatprep.subr.bf16.mxu0 0
    %1430 = vmatpush1.bf16.msra.mxu0 %v998
    %1431 = vmatprep.subr.bf16.mxu0 0
    %1432 = vmatpush1.bf16.msra.mxu0 %v999
    %1433 = vmatprep.subr.bf16.mxu0 0
    %1434 = vmatpush1.bf16.msra.mxu0 %v1000
    %1435 = vmatprep.subr.bf16.mxu0 0
    %1436 = vmatpush1.bf16.msra.mxu0 %v1001
    %1437 = vmatprep.subr.bf16.mxu0 0
    %1438 = vmatpush1.bf16.msra.mxu0 %v1002
    %1439 = vmatprep.subr.bf16.mxu0 0
    %1440 = vmatpush1.bf16.msra.mxu0 %v1003
    %1441 = vmatprep.subr.bf16.mxu0 0
    %1442 = vmatpush1.bf16.msra.mxu0 %v1004
    %1443 = vmatprep.subr.bf16.mxu0 0
    %1444 = vmatpush1.bf16.msra.mxu0 %v1005
    %1445 = vmatprep.subr.bf16.mxu0 0
    %1446 = vmatpush1.bf16.msra.mxu0 %v1006
    %1447 = vmatprep.subr.bf16.mxu0 0
    %1448 = vmatpush1.bf16.msra.mxu0 %v1007
    %1449 = vmatprep.subr.bf16.mxu0 0
    %1450 = vmatpush1.bf16.msra.mxu0 %v1008
    %1451 = vmatprep.subr.bf16.mxu0 0
    %1452 = vmatpush1.bf16.msra.mxu0 %v1009
    %1453 = vmatprep.subr.bf16.mxu0 0
    %1454 = vmatpush1.bf16.msra.mxu0 %v1010
    %1455 = vmatprep.subr.bf16.mxu0 0
    %1456 = vmatpush1.bf16.msra.mxu0 %v1011
    %1457 = vmatprep.subr.bf16.mxu0 0
    %1458 = vmatpush1.bf16.msra.mxu0 %v1012
    %1459 = vmatprep.subr.bf16.mxu0 0
    %1460 = vmatpush1.bf16.msra.mxu0 %v1013
    %1461 = vmatprep.mubr.bf16.mxu0 %v110
    %1462 = vmatmul.mubr.bf16.gmra.mrb[0].mxu0 %v109
    %v1463 = vpop.f32.mrb[0].mxu0
    %v1464 = vadd.f32 %v1423, %v1463
    %v1465 = vpop.f32.mrb[0].mxu0
    %v1466 = vpop.f32.mrb[0].mxu0
    %v1467 = vadd.f32 %v1426, %v1466
    %v1468 = vpop.f32.mrb[0].mxu0
    %1469 = vdwg.mxu0
    %v1470 = vmax.f32 %v1464, 0.0
    %v1471 = vmax.f32 %v1467, 0.0
    %v1472 = vpack.c.bf16 %v1471, %v1470
    %v1473 = vld [vmem:[#allocation7] sm:$0xf]
    %v1474 = vld [vmem:[#allocation7 + $0x4] sm:$0xf]
    %v1475 = vld [vmem:[#allocation7 + $0x8] sm:$0xf]
    %v1476 = vld [vmem:[#allocation7 + $0xc] sm:$0xf]
    %v1477 = vld [vmem:[#allocation7 + $0x10] sm:$0xf]
    %v1478 = vld [vmem:[#allocation7 + $0x14] sm:$0xf]
    %v1479 = vld [vmem:[#allocation7 + $0x18] sm:$0xf]
    %v1480 = vld [vmem:[#allocation7 + $0x1c] sm:$0xf]
    %v1481 = vld [vmem:[#allocation7 + $0x20] sm:$0xf]
    %v1482 = vld [vmem:[#allocation7 + $0x24] sm:$0xf]
    %v1483 = vld [vmem:[#allocation7 + $0x28] sm:$0xf]
    %v1484 = vld [vmem:[#allocation7 + $0x2c] sm:$0xf]
    %v1485 = vld [vmem:[#allocation7 + $0x30] sm:$0xf]
    %v1486 = vld [vmem:[#allocation7 + $0x34] sm:$0xf]
    %v1487 = vld [vmem:[#allocation7 + $0x38] sm:$0xf]
    %v1488 = vld [vmem:[#allocation7 + $0x3c] sm:$0xf]
    %v1489 = vld [vmem:[%s4] sm:$0x1]
    %v1491 = vlaneseq
    %v1492 = vshrl.u32 %v1491, 7
    %v1493 = vsub.s32 0, %v1492
    %v1494 = vrot.slane %v1489, %v1493
    %v1512 = vunpack.c.l.b16 %v1473
    %v1513 = vunpack.c.l.b16 %v1474
    %v1514 = vunpack.c.l.b16 %v1475
    %v1515 = vunpack.c.l.b16 %v1476
    %v1516 = vunpack.c.l.b16 %v1477
    %v1517 = vunpack.c.l.b16 %v1478
    %v1518 = vunpack.c.l.b16 %v1479
    %v1519 = vunpack.c.l.b16 %v1480
    %v1520 = vunpack.c.l.b16 %v1481
    %v1521 = vunpack.c.l.b16 %v1482
    %v1522 = vunpack.c.l.b16 %v1483
    %v1523 = vunpack.c.l.b16 %v1484
    %v1524 = vunpack.c.l.b16 %v1485
    %v1525 = vunpack.c.l.b16 %v1486
    %v1526 = vunpack.c.l.b16 %v1487
    %v1527 = vunpack.c.l.b16 %v1488
    %v1528 = vpack.c.b16 %v1513, %v1512
    %v1529 = vpack.c.b16 %v1515, %v1514
    %v1530 = vpack.c.b16 %v1517, %v1516
    %v1531 = vpack.c.b16 %v1519, %v1518
    %v1532 = vpack.c.b16 %v1521, %v1520
    %v1533 = vpack.c.b16 %v1523, %v1522
    %v1534 = vpack.c.b16 %v1525, %v1524
    %v1535 = vpack.c.b16 %v1527, %v1526
    %1544 = vmatprep.subr.bf16.mxu0 0
    %1545 = vmatpush1.bf16.msra.mxu0 %v1528
    %1546 = vmatprep.subr.bf16.mxu0 0
    %1547 = vmatpush1.bf16.msra.mxu0 %v1529
    %1548 = vmatprep.subr.bf16.mxu0 0
    %1549 = vmatpush1.bf16.msra.mxu0 %v1530
    %1550 = vmatprep.subr.bf16.mxu0 0
    %1551 = vmatpush1.bf16.msra.mxu0 %v1531
    %1552 = vmatprep.subr.bf16.mxu0 0
    %1553 = vmatpush1.bf16.msra.mxu0 %v1532
    %1554 = vmatprep.subr.bf16.mxu0 0
    %1555 = vmatpush1.bf16.msra.mxu0 %v1533
    %1556 = vmatprep.subr.bf16.mxu0 0
    %1557 = vmatpush1.bf16.msra.mxu0 %v1534
    %1558 = vmatprep.subr.bf16.mxu0 0
    %1559 = vmatpush1.bf16.msra.mxu0 %v1535
    %1560 = vmatprep.subr.bf16.mxu0 0
    %1561 = vmatpush1.bf16.msra.mxu0 0
    %1562 = vmatprep.subr.bf16.mxu0 0
    %1563 = vmatpush1.bf16.msra.mxu0 0
    %1564 = vmatprep.subr.bf16.mxu0 0
    %1565 = vmatpush1.bf16.msra.mxu0 0
    %1566 = vmatprep.subr.bf16.mxu0 0
    %1567 = vmatpush1.bf16.msra.mxu0 0
    %1568 = vmatprep.subr.bf16.mxu0 0
    %1569 = vmatpush1.bf16.msra.mxu0 0
    %1570 = vmatprep.subr.bf16.mxu0 0
    %1571 = vmatpush1.bf16.msra.mxu0 0
    %1572 = vmatprep.subr.bf16.mxu0 0
    %1573 = vmatpush1.bf16.msra.mxu0 0
    %1574 = vmatprep.subr.bf16.mxu0 0
    %1575 = vmatpush1.bf16.msra.mxu0 0
    %1576 = vmatprep.mubr.bf16.mxu0 0
    %1577 = vmatmul.mubr.bf16.gmra.mrb[0].mxu0 %v1472
    %v1578 = vpop.f32.mrb[0].mxu0
    %v1579 = vadd.f32 %v1494, %v1578
    %v1580 = vpop.f32.mrb[0].mxu0
    %v1581 = vpop.f32.mrb[0].mxu0
    %v1582 = vadd.f32 %v1494, %v1581
    %v1583 = vpop.f32.mrb[0].mxu0
    %1584 = vdwg.mxu0
    %v1585 = vpack.c.bf16 %v1582, %v1579
    %v1587 = vunpack.c.l.b16 %v1585
    %v1588 = vunpack.c.h.b16 %v1585
    %v1589 = vpack.c.b16 %v1587, %v1587
    %v1590 = vpack.c.b16 %v1588, %v1588
    %1593 = vst [vmem:[#allocation8] sm:$0xf] %v1589
    %1594 = vst [vmem:[#allocation8 + $0x4] sm:$0xf] %v1590
    // Predicated region
    $region34: #{tpu_custom_call.1} parent=1 // pred_check
      _
    $region35: #{tpu_custom_call.1} parent=1 // pred_check_branch
      %1596 = sbr.rel (0) target = $region37
    $region36: #{tpu_custom_call.1} parent=1 // pred_region
      %s1598 = ssub.s32 128, 64
      %1599 = vsyncadd [#allocation4], %s1598
      %s1600 = sshll.u32 [#allocation8], 4
      %s1601 = int_to_ptr.vmem [resolvable:$true] %s1600
      %1606 = dma.vmem_to_hbm [thread:$0]  %s1601, 64, %s5, [#allocation4], 64, 64, 4
    $region37: #{tpu_custom_call.1} parent=1 // pred_fallthru
      _
    // Predicated region
    $region38: #{tpu_custom_call.1} parent=1 // pred_check
      _
    $region39: #{tpu_custom_call.1} parent=1 // pred_check_branch
      %1608 = sbr.rel (0) target = $region41
    $region40: #{tpu_custom_call.1} parent=1 // pred_region
      %1609 = dma.done [#allocation4], 128
    $region41: #{tpu_custom_call.1} parent=1 // pred_fallthru
      _
    %1610 = vsyncpa [#allocation3], 1
    %1611 = vsyncpa [#allocation6], 1
    %1612 = vsyncpa [#allocation4], 1

</llo_original>
